<compile_context>
chip_gen: v7x
topology: tpu7x:2x2x1
jax: 0.10.0
libtpu: 0.0.40
codegen_flags: <defaults>
</compile_context>

<pallas_src>
import math

import jax
import jax.numpy as jnp
from jax.experimental import pallas as pl
from jax.experimental.pallas import tpu as pltpu


# ----------------------------- kernel body ----------------------------------
def _affine_kernel(x_ref, w_ref, b_ref, o_ref):
    # Single MXU pass, f32 accumulation, f32 bias add, cast only on the store.
    acc = jnp.dot(x_ref[...], w_ref[...], preferred_element_type=jnp.float32)
    o_ref[...] = (acc + b_ref[...]).astype(o_ref.dtype)


# ----------------------------- helpers ---------------------------------------
def _round_up(x, m):
    return ((x + m - 1) // m) * m


def _sublane(itemsize):
    if itemsize >= 4:
        return 8
    if itemsize == 2:
        return 16
    return 32          # 8-bit dtypes


def _device_budgets():
    """(tile_budget_bytes, vmem_limit_bytes).  Conservative (v7x: 64 MiB physical
    VMEM) unless a 128-MiB-VMEM generation (v5*/v6*) is positively identified."""
    try:
        kind = jax.devices()[0].device_kind.lower()
    except Exception:
        kind = ""
    if ("v5" in kind) or ("v6" in kind):
        return 56 * 1024 * 1024, 64 * 1024 * 1024
    return 26 * 1024 * 1024, 32 * 1024 * 1024


def _choose_pack(in_dim, out_dim, itemsize, pin_cap=2048, wbytes_cap=4 << 20):
    """Logical rows packed per kernel row.  Prefer the smallest P with
    P*out_dim % 128 == 0 (unmasked lane-dense stores); fall back to ~128-lane
    packing if the packed weight would get too large."""
    if out_dim >= 128 or in_dim == 0:
        return 1

    def ok(p):
        return (p * in_dim <= pin_cap
                and (p * in_dim) * (p * out_dim) * itemsize <= wbytes_cap)

    p = 128 // math.gcd(out_dim, 128)        # smallest P making pout a 128-multiple
    if ok(p):
        return p
    # Fallback: lane-sparse output (perf cliff only, still correct).
    p = max(1, 128 // out_dim)
    while p > 1 and not ok(p):
        p //= 2
    return max(p, 1)


# ------------------------ parameter folding / packing ------------------------
def pack_g_params(w1, b1, w2, b2, *, compute_dtype=None):
    """Fold linear1 + bias1 + linear2 into one affine map and lane-pack it.
    Call ONCE per weight set; reuse the result across g_forward_packed calls.

    w1: (in_dim, hidden) or None   (== linear1.weight.T; None if input_dim == 0)
    b1: (hidden,)                  (== bias1)
    w2: (hidden, out_dim)          (== linear2.weight.T)
    b2: (out_dim,)                 (== linear2.bias)
    """
    if compute_dtype is None:
        compute_dtype = w2.dtype
    f32 = jnp.float32
    out_dim = w2.shape[1]
    b = jnp.dot(b1.astype(f32), w2.astype(f32)) + b2.astype(f32)      # (out_dim,)

    if w1 is None or w1.shape[0] == 0:
        return dict(P=1, in_dim=0, out_dim=out_dim, Wp=None,
                    bp=b, dtype=compute_dtype)

    in_dim = w1.shape[0]
    W = jnp.dot(w1.astype(f32), w2.astype(f32))                       # (in, out)
    itemsize = jnp.dtype(compute_dtype).itemsize
    P = _choose_pack(in_dim, out_dim, itemsize)
    Wp = jnp.kron(jnp.eye(P, dtype=f32), W).astype(compute_dtype)     # block-diag
    bp = jnp.tile(b, P).reshape(1, P * out_dim)                       # f32 bias row
    return dict(P=P, in_dim=in_dim, out_dim=out_dim, Wp=Wp, bp=bp,
                dtype=compute_dtype)


# ------------------------------- forward -------------------------------------
def g_forward_packed(x, packed, *, block_rows=None):
    """Pallas equivalent of G.forward using pre-packed parameters."""
    if x.ndim < 2:
        raise RuntimeError("Must have batch dimension.")
    B = x.shape[0]
    P, in_dim, out_dim = packed["P"], packed["in_dim"], packed["out_dim"]
    dtype = packed["dtype"]

    if in_dim == 0:
        # out = linear2(bias1.repeat(B, 1)) — one broadcast row, no kernel needed.
        row = packed["bp"].astype(dtype).reshape(1, out_dim)
        return jnp.broadcast_to(row, (B, out_dim))

    Wp, bp = packed["Wp"], packed["bp"]
    pin, pout = P * in_dim, P * out_dim
    itemsize = jnp.dtype(dtype).itemsize
    sub = _sublane(itemsize)

    # ---- minimal padding: only up to P-1 rows, so x reshapes to packed rows ----
    Mp = pl.cdiv(B, P)                       # packed rows
    Bpack = Mp * P
    xp = x.astype(dtype)
    if Bpack != B:
        xp = jnp.pad(xp, ((0, Bpack - B), (0, 0)))
    xp = xp.reshape(Mp, pin)                 # free row-major reshape

    # ---- tile sizing: big tiles under a VMEM budget, >=2 grid steps ----------
    tile_budget, vmem_limit = _device_budgets()
    per_row = (pin + pout) * itemsize                      # x + out bytes / packed row
    fixed = 2 * pin * pout * itemsize + 2 * pout * 4       # weight + bias (2x: safe)
    avail = max(tile_budget - fixed, 2 * sub * per_row)
    bm_cap = max(sub, (avail // (2 * per_row)) // sub * sub)   # double-buffered tiles

    if block_rows is not None:
        bm = _round_up(max(int(block_rows), 1), sub)
    else:
        target = 2048                                       # packed rows per tile
        nblk = max(1, pl.cdiv(Mp, target))
        if Mp > sub:
            nblk = _round_up(max(nblk, 2), 2)               # keep both v7x TCs busy
        bm = _round_up(pl.cdiv(Mp, nblk), sub)
    bm = min(bm, bm_cap)
    bm = min(bm, _round_up(Mp, sub))
    bm = max(bm, sub)
    grid = (pl.cdiv(Mp, bm),)       # ragged last block handled by Pallas masking

    cost = pl.CostEstimate(
        flops=2 * Mp * pin * pout,
        transcendentals=0,
        bytes_accessed=(Mp * (pin + pout) + pin * pout) * itemsize + pout * 4,
    )

    out_p = pl.pallas_call(
        _affine_kernel,
        out_shape=jax.ShapeDtypeStruct((Mp, pout), dtype),
        grid_spec=pltpu.PrefetchScalarGridSpec(
            num_scalar_prefetch=0,
            grid=grid,
            in_specs=[
                pl.BlockSpec((bm, pin), lambda i: (i, 0)),    # x tile (pipelined)
                pl.BlockSpec((pin, pout), lambda i: (0, 0)),  # packed weight (resident)
                pl.BlockSpec((1, pout), lambda i: (0, 0)),    # packed bias (resident)
            ],
            out_specs=pl.BlockSpec((bm, pout), lambda i: (i, 0)),
        ),
        compiler_params=pltpu.CompilerParams(
            dimension_semantics=("parallel",),                # megacore split on v7x
            vmem_limit_bytes=vmem_limit,
        ),
        cost_estimate=cost,
    )(xp, Wp, bp)

    out = out_p.reshape(Bpack, out_dim)                       # free row-major reshape
    if Bpack != B:
        out = out[:B]
    return out


def g_forward(x, w1, b1, w2, b2, *, block_rows=None):
    """Convenience wrapper: pack + run.  Prefer pack_g_params()+g_forward_packed()
    when the same weights are reused across many calls."""
    packed = pack_g_params(w1, b1, w2, b2, compute_dtype=x.dtype)
    return g_forward_packed(x, packed, block_rows=block_rows)


# --------------------------------- demo ---------------------------------------
if __name__ == "__main__":
    INPUT_DIM, HIDDEN_DIM, OUTPUT_DIM = 16, 32, 8

    key = jax.random.PRNGKey(0)
    k_x, k_x2, k_w1, k_b1, k_w2, k_b2 = jax.random.split(key, 6)

    bound1 = 1.0 / jnp.sqrt(INPUT_DIM)
    bound2 = 1.0 / jnp.sqrt(HIDDEN_DIM)
    w1 = jax.random.uniform(k_w1, (INPUT_DIM, HIDDEN_DIM), jnp.float32,
                            -bound1, bound1)
    b1 = jax.random.normal(k_b1, (HIDDEN_DIM,), dtype=jnp.float32)
    w2 = jax.random.uniform(k_w2, (HIDDEN_DIM, OUTPUT_DIM), jnp.float32,
                            -bound2, bound2)
    b2 = jax.random.uniform(k_b2, (OUTPUT_DIM,), jnp.float32, -bound2, bound2)

    # Pack once per weight set (fold + kron hoisted out of the per-call path).
    packed = pack_g_params(w1, b1, w2, b2, compute_dtype=jnp.float32)

    def ref_fn(xx):                      # un-folded reference semantics
        return (xx @ w1 + b1) @ w2 + b2

    # Test 1: tiny batch (single partial block).
    x = jax.random.normal(k_x, (8, INPUT_DIM), dtype=jnp.float32)
    out = jax.block_until_ready(g_forward_packed(x, packed))
    assert out.shape == (8, OUTPUT_DIM)
    assert jnp.allclose(out, ref_fn(x), atol=1e-4, rtol=1e-4), \
        float(jnp.max(jnp.abs(out - ref_fn(x))))

    # Test 2: batch not a multiple of the packing factor, multi-step ragged grid.
    x2 = jax.random.normal(k_x2, (1000, INPUT_DIM), dtype=jnp.float32)
    out2 = jax.block_until_ready(g_forward_packed(x2, packed))
    assert out2.shape == (1000, OUTPUT_DIM)
    assert jnp.allclose(out2, ref_fn(x2), atol=1e-4, rtol=1e-4), \
        float(jnp.max(jnp.abs(out2 - ref_fn(x2))))

    print("KERNEL_OK")
</pallas_src>

<mosaic_0001>
module attributes {stable_mosaic.version = 11 : i64} {
  func.func @_affine_kernel(%arg0: i32, %arg1: memref<8x256xf32, #tpu.memory_space<vmem>>, %arg2: memref<256x128xf32, #tpu.memory_space<vmem>>, %arg3: memref<1x128xf32, #tpu.memory_space<vmem>>, %arg4: memref<8x128xf32, #tpu.memory_space<vmem>>) attributes {dimension_semantics = [#tpu.dimension_semantics<parallel>], iteration_bounds = array<i64: 1>, scalar_prefetch = 0 : i64, scratch_operands = 0 : i64, tpu.core_type = #tpu.core_type<tc>, window_params = [{transform_indices = @transform_0, window_bounds = array<i64: 8, 256>}, {pipeline_mode = #tpu.pipeline_mode<synchronous>, transform_indices = @transform_1, window_bounds = array<i64: 256, 128>}, {pipeline_mode = #tpu.pipeline_mode<synchronous>, transform_indices = @transform_2, window_bounds = array<i64: 1, 128>}, {transform_indices = @transform_3, window_bounds = array<i64: 8, 128>}]} {
    %c0 = arith.constant 0 : index
    %c0_0 = arith.constant 0 : index
    %0 = vector.load %arg1[%c0, %c0_0] : memref<8x256xf32, #tpu.memory_space<vmem>>, vector<8x256xf32>
    %c0_1 = arith.constant 0 : index
    %c0_2 = arith.constant 0 : index
    %1 = vector.load %arg2[%c0_1, %c0_2] : memref<256x128xf32, #tpu.memory_space<vmem>>, vector<256x128xf32>
    %cst = arith.constant dense<0.000000e+00> : vector<8x128xf32>
    %2 = tpu.matmul %0, %1, %cst {dimension_numbers = #tpu.dot_dimension_numbers<[1], [0], [0], [1], [0, 0, 1, 1], [], []>} : vector<8x256xf32>, vector<256x128xf32>, vector<8x128xf32> -> vector<8x128xf32>
    %c0_3 = arith.constant 0 : index
    %c0_4 = arith.constant 0 : index
    %3 = vector.load %arg3[%c0_3, %c0_4] : memref<1x128xf32, #tpu.memory_space<vmem>>, vector<1x128xf32>
    %4 = vector.broadcast %3 : vector<1x128xf32> to vector<8x128xf32>
    %5 = arith.addf %2, %4 : vector<8x128xf32>
    %c0_5 = arith.constant 0 : index
    %c0_6 = arith.constant 0 : index
    %6 = vector.load %arg4[%c0_5, %c0_6] : memref<8x128xf32, #tpu.memory_space<vmem>>, vector<8x128xf32>
    tpu.vector_store %arg4[%c0_5, %c0_6], %5 {strides = array<i32>} : memref<8x128xf32, #tpu.memory_space<vmem>>, vector<8x128xf32>,
    return
  }
  func.func @transform_0(%arg0: i32) -> (i32, i32) {
    %c0_i32 = arith.constant 0 : i32
    %c0_i32_0 = arith.constant 0 : i32
    return %arg0, %c0_i32 : i32, i32
  }
  func.func @transform_1(%arg0: i32) -> (i32, i32) {
    %c0_i32 = arith.constant 0 : i32
    %c0_i32_0 = arith.constant 0 : i32
    %c0_i32_1 = arith.constant 0 : i32
    return %c0_i32, %c0_i32_0 : i32, i32
  }
  func.func @transform_2(%arg0: i32) -> (i32, i32) {
    %c0_i32 = arith.constant 0 : i32
    %c0_i32_0 = arith.constant 0 : i32
    %c0_i32_1 = arith.constant 0 : i32
    return %c0_i32, %c0_i32_0 : i32, i32
  }
  func.func @transform_3(%arg0: i32) -> (i32, i32) {
    %c0_i32 = arith.constant 0 : i32
    %c0_i32_0 = arith.constant 0 : i32
    return %arg0, %c0_i32 : i32, i32
  }
}

</mosaic_0001>

<llo_original>
// kernel: tpu_custom_call.1
$region0: #{tpu_custom_call.1}
  #allocation0 [shape = 'u32[]', space=smem, size = 0x4, offset = 0x4, fixed_abs, tag = 'smem constant byte address 0x4 - core index']
  #allocation1 [shape = 'u32[144,128]{1,0:T(1,128)}', space=vmem, size = 0x12000, scoped, tag = 'internal scratch']
  %s0 = inlined_call_operand.hbm [shape: f32[1,256], index: 0, kind: input, shape index: {}]
  %s1 = inlined_call_operand.hbm [shape: f32[256,128], index: 1, kind: input, shape index: {}]
  %s2 = inlined_call_operand.vmem [shape: f32[1,128], index: 2, kind: input, shape index: {}]
  %s3 = inlined_call_operand.hbm [shape: f32[1,128], index: 3, kind: output, shape index: {}]
  %s4 = sld [smem:[#allocation0]]
  $region30: #{tpu_custom_call.1} parent=0
    _
  %s6 = ssub.s32 1, %s4
  %s7 = scalar_select 0, %s6, %s4
  $region1: #{tpu_custom_call.1} parent=0
    #allocation2 [shape = 'u8[8192]{0}', space=vmem, size = 0x2000, scoped, tag = 'input window, operand 0, single buffered']
    #allocation3 [shape = 's32[1]{0}', space=sflag, size = 0x4, scoped, tag = 'scoped memory for tpu_custom_call.1']
    #allocation4 [shape = 's32[1]{0}', space=sflag, size = 0x4, scoped, tag = 'scoped memory for tpu_custom_call.1']
    #allocation5 [shape = 'u8[131072]{0}', space=vmem, size = 0x20000, scoped, tag = 'input window, operand 1, single buffered']
    #allocation6 [shape = 's32[1]{0}', space=sflag, size = 0x4, scoped, tag = 'scoped memory for tpu_custom_call.1']
    #allocation7 [shape = 'u8[4096]{0}', space=vmem, size = 0x1000, scoped, tag = 'output window, operand 0, single buffered']
    %8 = vsyncpa [#allocation3], 0
    %9 = vsyncpa [#allocation6], 0
    %10 = vsyncpa [#allocation4], 0
    // Predicated region
    $region2: #{tpu_custom_call.1} parent=1 // pred_check
      _
    $region3: #{tpu_custom_call.1} parent=1 // pred_check_branch
      %12 = sbr.rel (0) target = $region5
    $region4: #{tpu_custom_call.1} parent=1 // pred_region
      %s14 = ssub.s32 256, 32
      %15 = vsyncadd [#allocation3], %s14
      %s16 = sshll.u32 [#allocation2], 4
      %s17 = int_to_ptr.vmem [resolvable:$true] %s16
      %22 = dma.hbm_to_vmem [thread:$0]  %s0, 32, %s17, [#allocation3], 32, 32, 2
    $region5: #{tpu_custom_call.1} parent=1 // pred_fallthru
      _
    // Predicated region
    $region6: #{tpu_custom_call.1} parent=1 // pred_check
      _
    $region7: #{tpu_custom_call.1} parent=1 // pred_check_branch
      %24 = sbr.rel (0) target = $region9
    $region8: #{tpu_custom_call.1} parent=1 // pred_region
      %s26 = ssub.s32 4096, 4096
      %27 = vsyncadd [#allocation6], %s26
      %s28 = sshll.u32 [#allocation5], 4
      %s29 = int_to_ptr.vmem [resolvable:$true] %s28
      %34 = dma.hbm_to_vmem [thread:$0]  %s1, 4096, %s29, [#allocation6], 128, 128, 8
    $region9: #{tpu_custom_call.1} parent=1 // pred_fallthru
      _
    // Predicated region
    $region10: #{tpu_custom_call.1} parent=1 // pred_check
      _
    $region11: #{tpu_custom_call.1} parent=1 // pred_check_branch
      %36 = sbr.rel (0) target = $region13
    $region12: #{tpu_custom_call.1} parent=1 // pred_region
      _
    $region13: #{tpu_custom_call.1} parent=1 // pred_fallthru
      _
    // Predicated region
    $region14: #{tpu_custom_call.1} parent=1 // pred_check
      _
    $region15: #{tpu_custom_call.1} parent=1 // pred_check_branch
      %38 = sbr.rel (0) target = $region17
    $region16: #{tpu_custom_call.1} parent=1 // pred_region
      %39 = dma.done [#allocation3], 256
    $region17: #{tpu_custom_call.1} parent=1 // pred_fallthru
      _
    // Predicated region
    $region18: #{tpu_custom_call.1} parent=1 // pred_check
      _
    $region19: #{tpu_custom_call.1} parent=1 // pred_check_branch
      %41 = sbr.rel (0) target = $region21
    $region20: #{tpu_custom_call.1} parent=1 // pred_region
      %42 = dma.done [#allocation6], 4096
    $region21: #{tpu_custom_call.1} parent=1 // pred_fallthru
      _
    %v43 = vld [vmem:[#allocation2] sm:$0x3]
    %v44 = vld [vmem:[#allocation2 + $0x2] sm:$0x3]
    %v45 = vld [vmem:[#allocation2 + $0x4] sm:$0x3]
    %v46 = vld [vmem:[#allocation2 + $0x6] sm:$0x3]
    %v47 = vld [vmem:[#allocation2 + $0x8] sm:$0x3]
    %v48 = vld [vmem:[#allocation2 + $0xa] sm:$0x3]
    %v49 = vld [vmem:[#allocation2 + $0xc] sm:$0x3]
    %v50 = vld [vmem:[#allocation2 + $0xe] sm:$0x3]
    %v51 = vld [vmem:[#allocation5] sm:$0xff]
    %v52 = vld [vmem:[#allocation5 + $0x8] sm:$0xff]
    %v53 = vld [vmem:[#allocation5 + $0x10] sm:$0xff]
    %v54 = vld [vmem:[#allocation5 + $0x18] sm:$0xff]
    %v55 = vld [vmem:[#allocation5 + $0x20] sm:$0xff]
    %v56 = vld [vmem:[#allocation5 + $0x28] sm:$0xff]
    %v57 = vld [vmem:[#allocation5 + $0x30] sm:$0xff]
    %v58 = vld [vmem:[#allocation5 + $0x38] sm:$0xff]
    %v59 = vld [vmem:[#allocation5 + $0x40] sm:$0xff]
    %v60 = vld [vmem:[#allocation5 + $0x48] sm:$0xff]
    %v61 = vld [vmem:[#allocation5 + $0x50] sm:$0xff]
    %v62 = vld [vmem:[#allocation5 + $0x58] sm:$0xff]
    %v63 = vld [vmem:[#allocation5 + $0x60] sm:$0xff]
    %v64 = vld [vmem:[#allocation5 + $0x68] sm:$0xff]
    %v65 = vld [vmem:[#allocation5 + $0x70] sm:$0xff]
    %v66 = vld [vmem:[#allocation5 + $0x78] sm:$0xff]
    %v67 = vld [vmem:[#allocation5 + $0x80] sm:$0xff]
    %v68 = vld [vmem:[#allocation5 + $0x88] sm:$0xff]
    %v69 = vld [vmem:[#allocation5 + $0x90] sm:$0xff]
    %v70 = vld [vmem:[#allocation5 + $0x98] sm:$0xff]
    %v71 = vld [vmem:[#allocation5 + $0xa0] sm:$0xff]
    %v72 = vld [vmem:[#allocation5 + $0xa8] sm:$0xff]
    %v73 = vld [vmem:[#allocation5 + $0xb0] sm:$0xff]
    %v74 = vld [vmem:[#allocation5 + $0xb8] sm:$0xff]
    %v75 = vld [vmem:[#allocation5 + $0xc0] sm:$0xff]
    %v76 = vld [vmem:[#allocation5 + $0xc8] sm:$0xff]
    %v77 = vld [vmem:[#allocation5 + $0xd0] sm:$0xff]
    %v78 = vld [vmem:[#allocation5 + $0xd8] sm:$0xff]
    %v79 = vld [vmem:[#allocation5 + $0xe0] sm:$0xff]
    %v80 = vld [vmem:[#allocation5 + $0xe8] sm:$0xff]
    %v81 = vld [vmem:[#allocation5 + $0xf0] sm:$0xff]
    %v82 = vld [vmem:[#allocation5 + $0xf8] sm:$0xff]
    %v83 = vld [vmem:[%s2] sm:$0x1]
    %v85 = vlaneseq
    %v86 = vshrl.u32 %v85, 7
    %v87 = vsub.s32 0, %v86
    %v88 = vrot.slane %v83, %v87
    %v98 = vcombine.low %v43, %v44
    %v99 = vcombine.low %v45, %v46
    %v100 = vcombine.low %v47, %v48
    %v101 = vcombine.low %v49, %v50
    %v103 = vunpack.c.l.s4 1966171168
    %v104 = vunpack.c.0.s8 %v103
    %v105 = vlaneseq
    %v106 = vshrl.u32 %v105, 7
    %v107 = vsub.s32 %v104, %v106
    %v108 = vrot.slane %v98, %v107
    %v110 = vunpack.c.l.s4 1966171168
    %v111 = vunpack.c.0.s8 %v110
    %v112 = vlaneseq
    %v113 = vshrl.u32 %v112, 7
    %v114 = vsub.s32 %v111, %v113
    %v115 = vrot.slane %v99, %v114
    %v117 = vunpack.c.l.s4 1966171168
    %v118 = vunpack.c.0.s8 %v117
    %v119 = vlaneseq
    %v120 = vshrl.u32 %v119, 7
    %v121 = vsub.s32 %v118, %v120
    %v122 = vrot.slane %v100, %v121
    %v124 = vunpack.c.l.s4 1966171168
    %v125 = vunpack.c.0.s8 %v124
    %v126 = vlaneseq
    %v127 = vshrl.u32 %v126, 7
    %v128 = vsub.s32 %v125, %v127
    %v129 = vrot.slane %v101, %v128
    %v130 = vcombine.low %v108, %v115
    %v131 = vcombine.high %v108, %v115
    %v132 = vcombine.low %v122, %v129
    %v133 = vcombine.high %v122, %v129
    %v135 = vunpack.c.l.s4 1966171168
    %v136 = vunpack.c.0.s8 %v135
    %v137 = vlaneseq
    %v138 = vshrl.u32 %v137, 7
    %v139 = vsub.s32 %v136, %v138
    %v140 = vrot.slane %v130, %v139
    %v142 = vunpack.c.l.s4 1966171168
    %v143 = vunpack.c.0.s8 %v142
    %v144 = vlaneseq
    %v145 = vshrl.u32 %v144, 7
    %v146 = vsub.s32 %v143, %v145
    %v147 = vrot.slane %v131, %v146
    %v149 = vunpack.c.l.s4 1966171168
    %v150 = vunpack.c.0.s8 %v149
    %v151 = vlaneseq
    %v152 = vshrl.u32 %v151, 7
    %v153 = vsub.s32 %v150, %v152
    %v154 = vrot.slane %v132, %v153
    %v156 = vunpack.c.l.s4 1966171168
    %v157 = vunpack.c.0.s8 %v156
    %v158 = vlaneseq
    %v159 = vshrl.u32 %v158, 7
    %v160 = vsub.s32 %v157, %v159
    %v161 = vrot.slane %v133, %v160
    %v162 = vcombine.low %v140, %v154
    %v163 = vcombine.low %v147, %v161
    %166 = vmatprep.subr.mxu0 0.0
    %167 = vmatpush1.msra.mxu0 %v51
    %168 = vmatprep.subr.mxu0 0.0
    %169 = vmatpush1.msra.mxu0 %v52
    %170 = vmatprep.subr.mxu0 0.0
    %171 = vmatpush1.msra.mxu0 %v53
    %172 = vmatprep.subr.mxu0 0.0
    %173 = vmatpush1.msra.mxu0 %v54
    %174 = vmatprep.subr.mxu0 0.0
    %175 = vmatpush1.msra.mxu0 %v55
    %176 = vmatprep.subr.mxu0 0.0
    %177 = vmatpush1.msra.mxu0 %v56
    %178 = vmatprep.subr.mxu0 0.0
    %179 = vmatpush1.msra.mxu0 %v57
    %180 = vmatprep.subr.mxu0 0.0
    %181 = vmatpush1.msra.mxu0 %v58
    %182 = vmatprep.subr.mxu0 0.0
    %183 = vmatpush1.msra.mxu0 %v59
    %184 = vmatprep.subr.mxu0 0.0
    %185 = vmatpush1.msra.mxu0 %v60
    %186 = vmatprep.subr.mxu0 0.0
    %187 = vmatpush1.msra.mxu0 %v61
    %188 = vmatprep.subr.mxu0 0.0
    %189 = vmatpush1.msra.mxu0 %v62
    %190 = vmatprep.subr.mxu0 0.0
    %191 = vmatpush1.msra.mxu0 %v63
    %192 = vmatprep.subr.mxu0 0.0
    %193 = vmatpush1.msra.mxu0 %v64
    %194 = vmatprep.subr.mxu0 0.0
    %195 = vmatpush1.msra.mxu0 %v65
    %196 = vmatprep.subr.mxu0 0.0
    %197 = vmatpush1.msra.mxu0 %v66
    %198 = vmatprep.subr.mxu0 0.0
    %199 = vmatpush1.msra.mxu0 %v67
    %200 = vmatprep.subr.mxu0 0.0
    %201 = vmatpush1.msra.mxu0 %v68
    %202 = vmatprep.subr.mxu0 0.0
    %203 = vmatpush1.msra.mxu0 %v69
    %204 = vmatprep.subr.mxu0 0.0
    %205 = vmatpush1.msra.mxu0 %v70
    %206 = vmatprep.subr.mxu0 0.0
    %207 = vmatpush1.msra.mxu0 %v71
    %208 = vmatprep.subr.mxu0 0.0
    %209 = vmatpush1.msra.mxu0 %v72
    %210 = vmatprep.subr.mxu0 0.0
    %211 = vmatpush1.msra.mxu0 %v73
    %212 = vmatprep.subr.mxu0 0.0
    %213 = vmatpush1.msra.mxu0 %v74
    %214 = vmatprep.subr.mxu0 0.0
    %215 = vmatpush1.msra.mxu0 %v75
    %216 = vmatprep.subr.mxu0 0.0
    %217 = vmatpush1.msra.mxu0 %v76
    %218 = vmatprep.subr.mxu0 0.0
    %219 = vmatpush1.msra.mxu0 %v77
    %220 = vmatprep.subr.mxu0 0.0
    %221 = vmatpush1.msra.mxu0 %v78
    %222 = vmatprep.subr.mxu0 0.0
    %223 = vmatpush1.msra.mxu0 %v79
    %224 = vmatprep.subr.mxu0 0.0
    %225 = vmatpush1.msra.mxu0 %v80
    %226 = vmatprep.subr.mxu0 0.0
    %227 = vmatpush1.msra.mxu0 %v81
    %228 = vmatprep.subr.mxu0 0.0
    %229 = vmatpush1.msra.mxu0 %v82
    %230 = vmatprep.mubr.f32.mxu0 %v163
    %231 = vmatmul.mubr.f32.gmra.mrb[0].mxu0 %v162
    %v232 = vpop.f32.mrb[0].mxu0
    %v233 = vadd.f32 %v88, %v232
    %v234 = vpop.f32.mrb[0].mxu0
    %235 = vdwg.mxu0
    %236 = vst [vmem:[#allocation7] sm:$0xff] %v233
    // Predicated region
    $region22: #{tpu_custom_call.1} parent=1 // pred_check
      _
    $region23: #{tpu_custom_call.1} parent=1 // pred_check_branch
      %238 = sbr.rel (0) target = $region25
    $region24: #{tpu_custom_call.1} parent=1 // pred_region
      %s240 = ssub.s32 128, 16
      %241 = vsyncadd [#allocation4], %s240
      %s242 = sshll.u32 [#allocation7], 4
      %s243 = int_to_ptr.vmem [resolvable:$true] %s242
      %248 = dma.vmem_to_hbm [thread:$0]  %s243, 16, %s3, [#allocation4], 16, 16, 1
    $region25: #{tpu_custom_call.1} parent=1 // pred_fallthru
      _
    // Predicated region
    $region26: #{tpu_custom_call.1} parent=1 // pred_check
      _
    $region27: #{tpu_custom_call.1} parent=1 // pred_check_branch
      %250 = sbr.rel (0) target = $region29
    $region28: #{tpu_custom_call.1} parent=1 // pred_region
      %251 = dma.done [#allocation4], 128
    $region29: #{tpu_custom_call.1} parent=1 // pred_fallthru
      _
    %252 = vsyncpa [#allocation3], 1
    %253 = vsyncpa [#allocation6], 1
    %254 = vsyncpa [#allocation4], 1

</llo_original>
